<compile_context>
chip_gen: v5e
topology: v5e:2x2
jax: 0.10.0
libtpu: 0.0.40
codegen_flags: <defaults>
</compile_context>

<pallas_src>
import jax
import jax.numpy as jnp
import numpy as np
from jax.experimental import pallas as pl
from jax.experimental.pallas import tpu as pltpu

BN_EPS = 1e-5
LANE = 128      # TPU lane width (last-dim alignment)
SUBLANE = 8     # TPU sublane count (second-minor alignment, f32)


def _round_up(a, b):
    return (a + b - 1) // b * b


def _vmem_limit_bytes():
    """Per-generation scoped-VMEM budget (None -> compiler default)."""
    try:
        kind = jax.devices()[0].device_kind.lower()
    except Exception:
        return None
    if "v7" in kind or "7x" in kind:
        return 44 * 1024 * 1024        # 64 MiB physical on v7x: leave headroom
    if "v5" in kind or "v6" in kind:
        return 100 * 1024 * 1024       # 128 MiB physical on v5e / v6e
    return None


# ----------------------------- Pallas kernels ------------------------------ #

def make_bn_stats_kernel(n_rows):
    """Tiled BatchNorm1d statistics: grid over row blocks, accumulate sum and
    sum-of-squares into the (1, F) outputs, finalize mean / biased variance on
    the last block (training-mode batch statistics, like nn.BatchNorm1d).
    Zero-padded rows contribute nothing; n_rows is the true row count."""
    def kernel(x_ref, mean_ref, var_ref):
        i = pl.program_id(0)

        @pl.when(i == 0)
        def _():
            mean_ref[...] = jnp.zeros_like(mean_ref)
            var_ref[...] = jnp.zeros_like(var_ref)

        x = x_ref[...]
        mean_ref[...] += jnp.sum(x, axis=0, keepdims=True)
        var_ref[...] += jnp.sum(x * x, axis=0, keepdims=True)

        @pl.when(i == pl.num_programs(0) - 1)
        def _():
            inv_n = 1.0 / float(n_rows)
            m = mean_ref[...] * inv_n
            mean_ref[...] = m
            # TODO(synk): single-pass E[x^2]-E[x]^2 cancels when |mean| >> std;
            # switch to a two-pass (mean, then centered SSE) scheme for that.
            var_ref[...] = var_ref[...] * inv_n - m * m

    return kernel


def gi_proj_kernel(x_ref, w_ref, b_ref, o_ref):
    """Hoisted GRU input projection (BatchNorm folded into w/b), N-tiled:
    reads a (Tc, Bp, F) block of x, writes a (Tc, Bp, TN) bf16 block of gi.
    bf16 MXU operands, f32 accumulation, bias added in f32."""
    Tt, Bp, F = x_ref.shape
    x2 = x_ref[...].reshape(Tt * Bp, F).astype(jnp.bfloat16)
    y = jnp.dot(x2, w_ref[...], preferred_element_type=jnp.float32) + b_ref[...]
    o_ref[...] = y.reshape(Tt, Bp, -1).astype(o_ref.dtype)


def bigru_fused_kernel(gif_ref, gib_ref, len_ref, whh_ref, bhn_ref,
                       of_ref, ob_ref, hf_ref, hb_ref):
    """Fused bidirectional GRU recurrence, one time chunk per grid step.

    grid = (num_time_chunks,) ("arbitrary"); the forward chain walks chunk c
    and the backward chain walks the mirrored chunk nC-1-c, both interleaved
    inside the same fori_loop so the two independent per-step chains hide each
    other's MXU/EUP latency (the 1-TC v5e/v6e case).  Hidden states are
    carried across chunks in VMEM scratch.  Only h @ W_hh sits on the serial
    chain; input gates gi are precomputed (bf16, upcast here).  Gate order
    along 3*Hp is [r, z, n]; the r/z hidden biases were pre-folded into gi,
    the n-gate hidden bias (multiplied by r in PyTorch's GRU) is bhn.
    """
    c = pl.program_id(0)
    nC = pl.num_programs(0)
    Tc, Bp, threeHp = gif_ref.shape
    Hp = threeHp // 3

    @pl.when(c == 0)
    def _():
        hf_ref[...] = jnp.zeros_like(hf_ref)
        hb_ref[...] = jnp.zeros_like(hb_ref)

    lengths = len_ref[...]                       # (Bp, 1) int32
    whh_f = whh_ref[0]                           # (Hp, 3Hp) bf16
    whh_b = whh_ref[1]
    bhn_f = bhn_ref[0]                           # (1, Hp) f32
    bhn_b = bhn_ref[1]

    t0_f = c * Tc                                # first global t of fwd chunk
    t0_b = (nC - 1 - c) * Tc                     # first global t of bwd chunk

    def cell(gi, h, whh, bhn):
        gh = jnp.dot(h.astype(jnp.bfloat16), whh,
                     preferred_element_type=jnp.float32)       # (Bp, 3Hp) f32
        gi = gi.astype(jnp.float32)
        r = jax.nn.sigmoid(gi[:, 0:Hp] + gh[:, 0:Hp])
        z = jax.nn.sigmoid(gi[:, Hp:2 * Hp] + gh[:, Hp:2 * Hp])
        n = jnp.tanh(gi[:, 2 * Hp:] + r * (gh[:, 2 * Hp:] + bhn))
        return (1.0 - z) * n + z * h

    def step(i, carry):
        h_f, h_b = carry
        # --- forward chain: local index i, global time t0_f + i -------------
        hf_new = cell(gif_ref[i], h_f, whh_f, bhn_f)
        valid_f = lengths > (t0_f + i)           # packed-sequence mask
        of_ref[i] = jnp.where(valid_f, hf_new, 0.0)
        h_f = jnp.where(valid_f, hf_new, h_f)
        # --- backward chain: local index Tc-1-i, global time t0_b + Tc-1-i --
        tl = Tc - 1 - i
        hb_new = cell(gib_ref[tl], h_b, whh_b, bhn_b)
        valid_b = lengths > (t0_b + tl)
        ob_ref[tl] = jnp.where(valid_b, hb_new, 0.0)
        h_b = jnp.where(valid_b, hb_new, h_b)
        return (h_f, h_b)

    # TODO(synk): h is rounded to bf16 each step before h@W_hh; validate drift
    # at production sequence lengths (hundreds of frames).
    h_f, h_b = jax.lax.fori_loop(0, Tc, step, (hf_ref[...], hb_ref[...]),
                                 unroll=4)
    hf_ref[...] = h_f
    hb_ref[...] = h_b


# ------------------------------- Parameters -------------------------------- #

def init_params(key, input_size, hidden_size):
    # Matches nn.GRU init U(-1/sqrt(H), 1/sqrt(H)); BatchNorm gamma=1, beta=0.
    # GRU weights stored pre-transposed ((F,3H)/(H,3H)), gate order [r,z,n].
    k = 1.0 / float(np.sqrt(hidden_size))
    keys = jax.random.split(key, 8)

    def u(kk, shape):
        return jax.random.uniform(kk, shape, jnp.float32, minval=-k, maxval=k)

    return dict(
        gamma=jnp.ones((input_size,), jnp.float32),
        beta=jnp.zeros((input_size,), jnp.float32),
        w_ih_f=u(keys[0], (input_size, 3 * hidden_size)),
        w_hh_f=u(keys[1], (hidden_size, 3 * hidden_size)),
        b_ih_f=u(keys[2], (3 * hidden_size,)),
        b_hh_f=u(keys[3], (3 * hidden_size,)),
        w_ih_b=u(keys[4], (input_size, 3 * hidden_size)),
        w_hh_b=u(keys[5], (hidden_size, 3 * hidden_size)),
        b_ih_b=u(keys[6], (3 * hidden_size,)),
        b_hh_b=u(keys[7], (3 * hidden_size,)),
    )


def _pad_gates(a, h, hp):
    """Zero-pad each of the 3 gate blocks along the last axis from h to hp."""
    if hp == h:
        return a
    pad = [(0, 0)] * (a.ndim - 1) + [(0, hp - h)]
    return jnp.concatenate(
        [jnp.pad(a[..., g * h:(g + 1) * h], pad) for g in range(3)], axis=-1)


# ------------------------------- Wrapper ----------------------------------- #

def rnn_block_forward(x, lengths, params, *, time_chunk=64):
    """RNNBlock forward: x (T, B, F) f32, lengths (B,) int -> ((T, B, H), lengths)."""
    T, B, F = x.shape
    H = params["w_hh_f"].shape[0]
    f32 = jnp.float32

    Hp = _round_up(H, LANE)          # lane-aligned hidden width
    Bp = _round_up(B, SUBLANE)       # sublane-aligned batch

    vmem_limit = _vmem_limit_bytes()
    vmem_budget = vmem_limit if vmem_limit is not None else 32 * 1024 * 1024

    # Recurrence time chunk: amortize per-grid-step overhead, capped so the
    # double-buffered gi (bf16) + output (f32) blocks of both directions plus
    # resident weights / scratch fit the per-generation VMEM budget.
    per_t = 2 * 2 * (Bp * 3 * Hp * 2 + Bp * Hp * 4)
    fixed = 2 * Hp * 3 * Hp * 2 + 2 * Bp * Hp * 4 + (2 << 20)
    tc_cap = max(1, (vmem_budget - fixed) // per_t)
    Tc = int(max(1, min(time_chunk, tc_cap, T)))
    Tp = _round_up(T, Tc)
    nC = Tp // Tc

    # Pad x exactly once; every kernel reads this buffer directly.
    x_pad = jnp.pad(x.astype(f32), ((0, Tp - T), (0, Bp - B), (0, 0)))

    # ---- 1. BatchNorm batch statistics (tiled reduction over rows) ----------
    rows = T * B                          # true row count
    total_rows = Tp * Bp                  # padded rows are zero -> no effect
    x_rows = x_pad.reshape(total_rows, F)  # free view (collapse leading dims)
    Rs = min(512, total_rows)
    while total_rows % Rs:
        Rs -= SUBLANE
    mean, var = pl.pallas_call(
        make_bn_stats_kernel(rows),
        out_shape=(jax.ShapeDtypeStruct((1, F), f32),
                   jax.ShapeDtypeStruct((1, F), f32)),
        grid=(total_rows // Rs,),
        in_specs=[pl.BlockSpec((Rs, F), lambda i: (i, 0))],
        out_specs=(pl.BlockSpec((1, F), lambda i: (0, 0)),
                   pl.BlockSpec((1, F), lambda i: (0, 0))),
        compiler_params=pltpu.CompilerParams(
            dimension_semantics=("arbitrary",),
            vmem_limit_bytes=vmem_limit),
    )(x_rows)
    mean, var = mean[0], var[0]

    # ---- 2. Fold the BN affine into the GRU input projection ---------------
    scale = params["gamma"] * jax.lax.rsqrt(var + BN_EPS)        # (F,)
    shift = params["beta"] - mean * scale                         # (F,)

    def fold_dir(w_ih, b_ih, b_hh):
        w_eff = scale[:, None] * w_ih                    # (F, 3H)
        b_eff = b_ih + shift @ w_ih                      # (3H,)
        b_eff = b_eff.at[:2 * H].add(b_hh[:2 * H])       # pre-sum r,z hh bias
        return (_pad_gates(w_eff, H, Hp),                # (F, 3Hp)
                _pad_gates(b_eff[None, :], H, Hp))       # (1, 3Hp)

    wif, bif = fold_dir(params["w_ih_f"], params["b_ih_f"], params["b_hh_f"])
    wib, bib = fold_dir(params["w_ih_b"], params["b_ih_b"], params["b_hh_b"])
    w_cat = jnp.concatenate([wif, wib], axis=1).astype(jnp.bfloat16)  # (F,6Hp)
    b_cat = jnp.concatenate([bif, bib], axis=1)                       # (1,6Hp)

    def pad_hh(w_hh):                                    # (H,3H) -> (Hp,3Hp)
        return jnp.pad(_pad_gates(w_hh, H, Hp), ((0, Hp - H), (0, 0)))

    whh = jnp.stack([pad_hh(params["w_hh_f"]),
                     pad_hh(params["w_hh_b"])]).astype(jnp.bfloat16)  # (2,Hp,3Hp)
    bhn = jnp.stack([jnp.pad(params["b_hh_f"][2 * H:], (0, Hp - H))[None, :],
                     jnp.pad(params["b_hh_b"][2 * H:], (0, Hp - H))[None, :]])

    # ---- 3. Hoisted input projection: (time-block, N-block) grid, bf16 gi ---
    sixHp = 6 * Hp
    TN = min(sixHp, 512)                 # lane tile of the gate dimension
    while sixHp % TN:
        TN -= LANE
    nN = sixHp // TN

    gi = pl.pallas_call(
        gi_proj_kernel,
        out_shape=jax.ShapeDtypeStruct((Tp, Bp, sixHp), jnp.bfloat16),
        grid=(nC, nN),
        in_specs=[pl.BlockSpec((Tc, Bp, F), lambda i, j: (i, 0, 0)),
                  pl.BlockSpec((F, TN), lambda i, j: (0, j)),
                  pl.BlockSpec((1, TN), lambda i, j: (0, j))],
        out_specs=pl.BlockSpec((Tc, Bp, TN), lambda i, j: (i, 0, j)),
        compiler_params=pltpu.CompilerParams(
            dimension_semantics=("parallel", "parallel"),
            vmem_limit_bytes=vmem_limit),
    )(x_pad, w_cat, b_cat)

    # ---- 4. Fused bidirectional GRU recurrence (time-chunked) ---------------
    len_pad = jnp.pad(lengths.astype(jnp.int32), (0, Bp - B)).reshape(Bp, 1)

    out_f, out_b = pl.pallas_call(
        bigru_fused_kernel,
        out_shape=(jax.ShapeDtypeStruct((Tp, Bp, Hp), f32),
                   jax.ShapeDtypeStruct((Tp, Bp, Hp), f32)),
        grid=(nC,),
        in_specs=[
            pl.BlockSpec((Tc, Bp, 3 * Hp), lambda c: (c, 0, 0)),           # gi fwd
            pl.BlockSpec((Tc, Bp, 3 * Hp), lambda c: (nC - 1 - c, 0, 1)),  # gi bwd
            pl.BlockSpec((Bp, 1), lambda c: (0, 0)),
            pl.BlockSpec((2, Hp, 3 * Hp), lambda c: (0, 0, 0)),
            pl.BlockSpec((2, 1, Hp), lambda c: (0, 0, 0)),
        ],
        out_specs=(pl.BlockSpec((Tc, Bp, Hp), lambda c: (c, 0, 0)),
                   pl.BlockSpec((Tc, Bp, Hp), lambda c: (nC - 1 - c, 0, 0))),
        scratch_shapes=[pltpu.VMEM((Bp, Hp), f32),
                        pltpu.VMEM((Bp, Hp), f32)],
        compiler_params=pltpu.CompilerParams(
            dimension_semantics=("arbitrary",),
            vmem_limit_bytes=vmem_limit),
    )(gi, gi, len_pad, whh, bhn)

    # XLA fuses this add+slice into a single pass over the output.
    # TODO(synk): when stacking RNNBlocks, keep the (Tp,Bp,Hp) padded sum
    # (lane-aligned input for the next block) instead of de-padding here; also
    # assumes max(lengths) == T (no pad_packed_sequence-style time truncation).
    out = (out_f + out_b)[:T, :B, :H]
    return out, lengths


# ----------------------- Pure-JAX reference (checking) ---------------------- #

def reference_forward(x, lengths, params):
    T, B, F = x.shape
    H = params["w_hh_f"].shape[0]
    x2 = x.reshape(T * B, F)
    mean = x2.mean(axis=0)
    var = ((x2 - mean) ** 2).mean(axis=0)
    xn = ((x2 - mean) / jnp.sqrt(var + BN_EPS) * params["gamma"]
          + params["beta"]).reshape(T, B, F)

    def cell(x_t, h, wih, whh, bih, bhh):
        gi = x_t @ wih + bih
        gh = h @ whh + bhh
        r = jax.nn.sigmoid(gi[:, :H] + gh[:, :H])
        z = jax.nn.sigmoid(gi[:, H:2 * H] + gh[:, H:2 * H])
        n = jnp.tanh(gi[:, 2 * H:] + r * gh[:, 2 * H:])
        return (1.0 - z) * n + z * h

    def run(reverse, wih, whh, bih, bhh):
        h = jnp.zeros((B, H), jnp.float32)
        outs = [None] * T
        order = range(T - 1, -1, -1) if reverse else range(T)
        for t in order:
            h_new = cell(xn[t], h, wih, whh, bih, bhh)
            valid = (lengths > t)[:, None]
            outs[t] = jnp.where(valid, h_new, 0.0)
            h = jnp.where(valid, h_new, h)
        return jnp.stack(outs)

    fwd = run(False, params["w_ih_f"], params["w_hh_f"],
              params["b_ih_f"], params["b_hh_f"])
    bwd = run(True, params["w_ih_b"], params["w_hh_b"],
              params["b_ih_b"], params["b_hh_b"])
    return fwd + bwd, lengths


# --------------------------------- Main ------------------------------------- #

if __name__ == "__main__":
    T, B, F, H = 20, 4, 32, 32
    key = jax.random.PRNGKey(0)
    kx, kp = jax.random.split(key)
    x = jax.random.normal(kx, (T, B, F), jnp.float32)
    lengths = jnp.array([20, 15, 9, 5], dtype=jnp.int32)   # max(lengths) == T
    params = init_params(kp, F, H)

    # time_chunk=8 at this tiny T exercises multi-chunk + time padding; the
    # default (64, VMEM-capped) is what production sizes should use.
    out, out_lengths = rnn_block_forward(x, lengths, params, time_chunk=8)
    out = jax.block_until_ready(out)

    ref, _ = reference_forward(x, lengths, params)
    # bf16 MXU operands + bf16 gi (f32 gate math / hidden state) -> loose tol.
    np.testing.assert_allclose(np.asarray(out), np.asarray(ref),
                               atol=5e-2, rtol=5e-2)
    assert out.shape == (T, B, H)
    assert np.array_equal(np.asarray(out_lengths), np.asarray(lengths))
    print("KERNEL_OK")
</pallas_src>

<mosaic_0001>
module attributes {stable_mosaic.version = 11 : i64} {
  func.func @kernel(%arg0: i32, %arg1: memref<192x32xf32, #tpu.memory_space<vmem>>, %arg2: memref<1x32xf32, #tpu.memory_space<vmem>>, %arg3: memref<1x32xf32, #tpu.memory_space<vmem>>) attributes {dimension_semantics = [#tpu.dimension_semantics<arbitrary>], iteration_bounds = array<i64: 1>, scalar_prefetch = 0 : i64, scratch_operands = 0 : i64, tpu.core_type = #tpu.core_type<tc>, window_params = [{transform_indices = @transform_0, window_bounds = array<i64: 192, 32>}, {pipeline_mode = #tpu.pipeline_mode<synchronous>, transform_indices = @transform_1, window_bounds = array<i64: 1, 32>}, {pipeline_mode = #tpu.pipeline_mode<synchronous>, transform_indices = @transform_2, window_bounds = array<i64: 1, 32>}]} {
    %c0_i32 = arith.constant 0 : i32
    %0 = arith.cmpi eq, %arg0, %c0_i32 : i32
    %1 = arith.extui %0 : i1 to i32
    %c0_i32_0 = arith.constant 0 : i32
    %2 = arith.cmpi ne, %1, %c0_i32_0 : i32
    scf.if %2 {
      %cst_13 = arith.constant 0.000000e+00 : f32
      %18 = vector.broadcast %cst_13 : f32 to vector<1x32xf32>
      %c0_14 = arith.constant 0 : index
      %c0_15 = arith.constant 0 : index
      %19 = vector.load %arg2[%c0_14, %c0_15] : memref<1x32xf32, #tpu.memory_space<vmem>>, vector<1x32xf32>
      tpu.vector_store %arg2[%c0_14, %c0_15], %18 {strides = array<i32>} : memref<1x32xf32, #tpu.memory_space<vmem>>, vector<1x32xf32>,
      %cst_16 = arith.constant 0.000000e+00 : f32
      %20 = vector.broadcast %cst_16 : f32 to vector<1x32xf32>
      %c0_17 = arith.constant 0 : index
      %c0_18 = arith.constant 0 : index
      %21 = vector.load %arg3[%c0_17, %c0_18] : memref<1x32xf32, #tpu.memory_space<vmem>>, vector<1x32xf32>
      tpu.vector_store %arg3[%c0_17, %c0_18], %20 {strides = array<i32>} : memref<1x32xf32, #tpu.memory_space<vmem>>, vector<1x32xf32>,
    } else {
    }
    %c0 = arith.constant 0 : index
    %c0_1 = arith.constant 0 : index
    %3 = vector.load %arg1[%c0, %c0_1] : memref<192x32xf32, #tpu.memory_space<vmem>>, vector<192x32xf32>
    %c0_2 = arith.constant 0 : index
    %c0_3 = arith.constant 0 : index
    %4 = vector.load %arg2[%c0_2, %c0_3] : memref<1x32xf32, #tpu.memory_space<vmem>>, vector<1x32xf32>
    %cst = arith.constant dense<0.000000e+00> : vector<32xf32>
    %5 = vector.multi_reduction <add>, %3, %cst [0] : vector<192x32xf32> to vector<32xf32>
    %6 = vector.shape_cast %5 : vector<32xf32> to vector<1x32xf32>
    %7 = arith.addf %4, %6 : vector<1x32xf32>
    %c0_4 = arith.constant 0 : index
    %c0_5 = arith.constant 0 : index
    %8 = vector.load %arg2[%c0_4, %c0_5] : memref<1x32xf32, #tpu.memory_space<vmem>>, vector<1x32xf32>
    tpu.vector_store %arg2[%c0_4, %c0_5], %7 {strides = array<i32>} : memref<1x32xf32, #tpu.memory_space<vmem>>, vector<1x32xf32>,
    %c0_6 = arith.constant 0 : index
    %c0_7 = arith.constant 0 : index
    %9 = vector.load %arg3[%c0_6, %c0_7] : memref<1x32xf32, #tpu.memory_space<vmem>>, vector<1x32xf32>
    %10 = arith.mulf %3, %3 : vector<192x32xf32>
    %cst_8 = arith.constant dense<0.000000e+00> : vector<32xf32>
    %11 = vector.multi_reduction <add>, %10, %cst_8 [0] : vector<192x32xf32> to vector<32xf32>
    %12 = vector.shape_cast %11 : vector<32xf32> to vector<1x32xf32>
    %13 = arith.addf %9, %12 : vector<1x32xf32>
    %c0_9 = arith.constant 0 : index
    %c0_10 = arith.constant 0 : index
    %14 = vector.load %arg3[%c0_9, %c0_10] : memref<1x32xf32, #tpu.memory_space<vmem>>, vector<1x32xf32>
    tpu.vector_store %arg3[%c0_9, %c0_10], %13 {strides = array<i32>} : memref<1x32xf32, #tpu.memory_space<vmem>>, vector<1x32xf32>,
    %c0_i32_11 = arith.constant 0 : i32
    %15 = arith.cmpi eq, %arg0, %c0_i32_11 : i32
    %16 = arith.extui %15 : i1 to i32
    %c0_i32_12 = arith.constant 0 : i32
    %17 = arith.cmpi ne, %16, %c0_i32_12 : i32
    scf.if %17 {
      %c0_13 = arith.constant 0 : index
      %c0_14 = arith.constant 0 : index
      %18 = vector.load %arg2[%c0_13, %c0_14] : memref<1x32xf32, #tpu.memory_space<vmem>>, vector<1x32xf32>
      %cst_15 = arith.constant 1.250000e-02 : f32
      %19 = vector.broadcast %cst_15 : f32 to vector<1x32xf32>
      %20 = arith.mulf %18, %19 : vector<1x32xf32>
      %c0_16 = arith.constant 0 : index
      %c0_17 = arith.constant 0 : index
      %21 = vector.load %arg2[%c0_16, %c0_17] : memref<1x32xf32, #tpu.memory_space<vmem>>, vector<1x32xf32>
      tpu.vector_store %arg2[%c0_16, %c0_17], %20 {strides = array<i32>} : memref<1x32xf32, #tpu.memory_space<vmem>>, vector<1x32xf32>,
      %c0_18 = arith.constant 0 : index
      %c0_19 = arith.constant 0 : index
      %22 = vector.load %arg3[%c0_18, %c0_19] : memref<1x32xf32, #tpu.memory_space<vmem>>, vector<1x32xf32>
      %cst_20 = arith.constant 1.250000e-02 : f32
      %23 = vector.broadcast %cst_20 : f32 to vector<1x32xf32>
      %24 = arith.mulf %22, %23 : vector<1x32xf32>
      %25 = arith.mulf %20, %20 : vector<1x32xf32>
      %26 = arith.subf %24, %25 : vector<1x32xf32>
      %c0_21 = arith.constant 0 : index
      %c0_22 = arith.constant 0 : index
      %27 = vector.load %arg3[%c0_21, %c0_22] : memref<1x32xf32, #tpu.memory_space<vmem>>, vector<1x32xf32>
      tpu.vector_store %arg3[%c0_21, %c0_22], %26 {strides = array<i32>} : memref<1x32xf32, #tpu.memory_space<vmem>>, vector<1x32xf32>,
    } else {
    }
    return
  }
  func.func @transform_0(%arg0: i32) -> (i32, i32) {
    %c0_i32 = arith.constant 0 : i32
    %c0_i32_0 = arith.constant 0 : i32
    return %arg0, %c0_i32 : i32, i32
  }
  func.func @transform_1(%arg0: i32) -> (i32, i32) {
    %c0_i32 = arith.constant 0 : i32
    %c0_i32_0 = arith.constant 0 : i32
    %c0_i32_1 = arith.constant 0 : i32
    return %c0_i32, %c0_i32_0 : i32, i32
  }
  func.func @transform_2(%arg0: i32) -> (i32, i32) {
    %c0_i32 = arith.constant 0 : i32
    %c0_i32_0 = arith.constant 0 : i32
    %c0_i32_1 = arith.constant 0 : i32
    return %c0_i32, %c0_i32_0 : i32, i32
  }
}

</mosaic_0001>

<llo_original>
// kernel: tpu_custom_call.1
$region0: #{tpu_custom_call.1}
  #allocation0 [shape = 'u32[]', space=smem, size = 0x4, offset = 0x4, fixed_abs, tag = 'smem constant byte address 0x4 - core index']
  #allocation1 [shape = 'u32[72,128]{1,0:T(1,128)}', space=vmem, size = 0x9000, scoped, tag = 'internal scratch']
  %s0 = inlined_call_operand.vmem [shape: f32[192,32], index: 0, kind: input, shape index: {}]
  %s1 = inlined_call_operand.hbm [shape: f32[1,32], index: 1, kind: output, shape index: {0}]
  %s2 = inlined_call_operand.hbm [shape: f32[1,32], index: 2, kind: output, shape index: {1}]
  %3 = xla_tuple %s1, %s2
  %s4 = sld [smem:[#allocation0]]
  $region30: #{tpu_custom_call.1} parent=0
    _
  %s6 = ssub.s32 1, %s4
  %s7 = scalar_select 0, %s6, %s4
  $region1: #{tpu_custom_call.1} parent=0
    #allocation2 [shape = 'u8[512]{0}', space=vmem, size = 0x400, scoped, tag = 'output window, operand 0, single buffered']
    #allocation3 [shape = 's32[1]{0}', space=sflag, size = 0x4, scoped, tag = 'scoped memory for tpu_custom_call.1']
    #allocation4 [shape = 'u8[512]{0}', space=vmem, size = 0x400, scoped, tag = 'output window, operand 1, single buffered']
    #allocation5 [shape = 's32[1]{0}', space=sflag, size = 0x4, scoped, tag = 'scoped memory for tpu_custom_call.1']
    %8 = vsyncpa [#allocation3], 0
    %9 = vsyncpa [#allocation5], 0
    // Predicated region
    $region2: #{tpu_custom_call.1} parent=1 // pred_check
      _
    $region3: #{tpu_custom_call.1} parent=1 // pred_check_branch
      %11 = sbr.rel (0) target = $region5
    $region4: #{tpu_custom_call.1} parent=1 // pred_region
      _
    $region5: #{tpu_custom_call.1} parent=1 // pred_fallthru
      _
    %p12 = scmp.eq.s32.totalorder 0, 0
    // Predicated region
    $region6: #{tpu_custom_call.1} parent=1 // pred_check
      %p13 = pneg %p12
    $region7: #{tpu_custom_call.1} parent=1 // pred_check_branch
      %15 = sbr.rel (%p13) target = $region9
    $region8: #{tpu_custom_call.1} parent=1 // pred_region
      %vm16 = vcmask 253952
      %17 = vst.msk [vmem:[#allocation2] sm:$0x1] %vm16, 0.0
      %18 = vst.msk [vmem:[#allocation4] sm:$0x1] %vm16, 0.0
    $region9: #{tpu_custom_call.1} parent=1 // pred_fallthru
      _
    %v19 = vld [vmem:[%s0] sm:$0xff]
    %v20 = vld [vmem:[%s0 + $0x8] sm:$0xff]
    %v21 = vld [vmem:[%s0 + $0x10] sm:$0xff]
    %v22 = vld [vmem:[%s0 + $0x18] sm:$0xff]
    %v23 = vld [vmem:[%s0 + $0x20] sm:$0xff]
    %v24 = vld [vmem:[%s0 + $0x28] sm:$0xff]
    %v25 = vld [vmem:[%s0 + $0x30] sm:$0xff]
    %v26 = vld [vmem:[%s0 + $0x38] sm:$0xff]
    %v27 = vld [vmem:[%s0 + $0x40] sm:$0xff]
    %v28 = vld [vmem:[%s0 + $0x48] sm:$0xff]
    %v29 = vld [vmem:[%s0 + $0x50] sm:$0xff]
    %v30 = vld [vmem:[%s0 + $0x58] sm:$0xff]
    %v31 = vld [vmem:[%s0 + $0x60] sm:$0xff]
    %v32 = vld [vmem:[%s0 + $0x68] sm:$0xff]
    %v33 = vld [vmem:[%s0 + $0x70] sm:$0xff]
    %v34 = vld [vmem:[%s0 + $0x78] sm:$0xff]
    %v35 = vld [vmem:[%s0 + $0x80] sm:$0xff]
    %v36 = vld [vmem:[%s0 + $0x88] sm:$0xff]
    %v37 = vld [vmem:[%s0 + $0x90] sm:$0xff]
    %v38 = vld [vmem:[%s0 + $0x98] sm:$0xff]
    %v39 = vld [vmem:[%s0 + $0xa0] sm:$0xff]
    %v40 = vld [vmem:[%s0 + $0xa8] sm:$0xff]
    %v41 = vld [vmem:[%s0 + $0xb0] sm:$0xff]
    %v42 = vld [vmem:[%s0 + $0xb8] sm:$0xff]
    %v43 = vld [vmem:[#allocation2] sm:$0x1]
    %vm44 = vcmask 261120
    %v45 = vsel %vm44, %v19, 0.0
    %v46 = vsel %vm44, %v20, 0.0
    %v47 = vadd.f32 %v45, %v46
    %v48 = vsel %vm44, %v21, 0.0
    %v49 = vadd.f32 %v47, %v48
    %v50 = vsel %vm44, %v22, 0.0
    %v51 = vadd.f32 %v49, %v50
    %v52 = vsel %vm44, %v23, 0.0
    %v53 = vadd.f32 %v51, %v52
    %v54 = vsel %vm44, %v24, 0.0
    %v55 = vadd.f32 %v53, %v54
    %v56 = vsel %vm44, %v25, 0.0
    %v57 = vadd.f32 %v55, %v56
    %v58 = vsel %vm44, %v26, 0.0
    %v59 = vadd.f32 %v57, %v58
    %v60 = vsel %vm44, %v27, 0.0
    %v61 = vadd.f32 %v59, %v60
    %v62 = vsel %vm44, %v28, 0.0
    %v63 = vadd.f32 %v61, %v62
    %v64 = vsel %vm44, %v29, 0.0
    %v65 = vadd.f32 %v63, %v64
    %v66 = vsel %vm44, %v30, 0.0
    %v67 = vadd.f32 %v65, %v66
    %v68 = vsel %vm44, %v31, 0.0
    %v69 = vadd.f32 %v67, %v68
    %v70 = vsel %vm44, %v32, 0.0
    %v71 = vadd.f32 %v69, %v70
    %v72 = vsel %vm44, %v33, 0.0
    %v73 = vadd.f32 %v71, %v72
    %v74 = vsel %vm44, %v34, 0.0
    %v75 = vadd.f32 %v73, %v74
    %v76 = vsel %vm44, %v35, 0.0
    %v77 = vadd.f32 %v75, %v76
    %v78 = vsel %vm44, %v36, 0.0
    %v79 = vadd.f32 %v77, %v78
    %v80 = vsel %vm44, %v37, 0.0
    %v81 = vadd.f32 %v79, %v80
    %v82 = vsel %vm44, %v38, 0.0
    %v83 = vadd.f32 %v81, %v82
    %v84 = vsel %vm44, %v39, 0.0
    %v85 = vadd.f32 %v83, %v84
    %v86 = vsel %vm44, %v40, 0.0
    %v87 = vadd.f32 %v85, %v86
    %v88 = vsel %vm44, %v41, 0.0
    %v89 = vadd.f32 %v87, %v88
    %v90 = vsel %vm44, %v42, 0.0
    %v91 = vadd.f32 %v89, %v90
    %v92 = vrot.slane %v91, 4
    %v93 = vadd.f32 %v91, %v92
    %v94 = vrot.slane %v93, 2
    %v95 = vadd.f32 %v93, %v94
    %v96 = vrot.slane %v95, 1
    %v97 = vadd.f32 %v95, %v96
    %v98 = vadd.f32 %v43, %v97
    %vm99 = vcmask 253952
    %100 = vst.msk [vmem:[#allocation2] sm:$0x1] %vm99, %v98
    %v101 = vld [vmem:[#allocation4] sm:$0x1]
    %v102 = vmul.f32 %v19, %v19
    %v103 = vmul.f32 %v20, %v20
    %v104 = vmul.f32 %v21, %v21
    %v105 = vmul.f32 %v22, %v22
    %v106 = vmul.f32 %v23, %v23
    %v107 = vmul.f32 %v24, %v24
    %v108 = vmul.f32 %v25, %v25
    %v109 = vmul.f32 %v26, %v26
    %v110 = vmul.f32 %v27, %v27
    %v111 = vmul.f32 %v28, %v28
    %v112 = vmul.f32 %v29, %v29
    %v113 = vmul.f32 %v30, %v30
    %v114 = vmul.f32 %v31, %v31
    %v115 = vmul.f32 %v32, %v32
    %v116 = vmul.f32 %v33, %v33
    %v117 = vmul.f32 %v34, %v34
    %v118 = vmul.f32 %v35, %v35
    %v119 = vmul.f32 %v36, %v36
    %v120 = vmul.f32 %v37, %v37
    %v121 = vmul.f32 %v38, %v38
    %v122 = vmul.f32 %v39, %v39
    %v123 = vmul.f32 %v40, %v40
    %v124 = vmul.f32 %v41, %v41
    %v125 = vmul.f32 %v42, %v42
    %v126 = vsel %vm44, %v102, 0.0
    %v127 = vsel %vm44, %v103, 0.0
    %v128 = vadd.f32 %v126, %v127
    %v129 = vsel %vm44, %v104, 0.0
    %v130 = vadd.f32 %v128, %v129
    %v131 = vsel %vm44, %v105, 0.0
    %v132 = vadd.f32 %v130, %v131
    %v133 = vsel %vm44, %v106, 0.0
    %v134 = vadd.f32 %v132, %v133
    %v135 = vsel %vm44, %v107, 0.0
    %v136 = vadd.f32 %v134, %v135
    %v137 = vsel %vm44, %v108, 0.0
    %v138 = vadd.f32 %v136, %v137
    %v139 = vsel %vm44, %v109, 0.0
    %v140 = vadd.f32 %v138, %v139
    %v141 = vsel %vm44, %v110, 0.0
    %v142 = vadd.f32 %v140, %v141
    %v143 = vsel %vm44, %v111, 0.0
    %v144 = vadd.f32 %v142, %v143
    %v145 = vsel %vm44, %v112, 0.0
    %v146 = vadd.f32 %v144, %v145
    %v147 = vsel %vm44, %v113, 0.0
    %v148 = vadd.f32 %v146, %v147
    %v149 = vsel %vm44, %v114, 0.0
    %v150 = vadd.f32 %v148, %v149
    %v151 = vsel %vm44, %v115, 0.0
    %v152 = vadd.f32 %v150, %v151
    %v153 = vsel %vm44, %v116, 0.0
    %v154 = vadd.f32 %v152, %v153
    %v155 = vsel %vm44, %v117, 0.0
    %v156 = vadd.f32 %v154, %v155
    %v157 = vsel %vm44, %v118, 0.0
    %v158 = vadd.f32 %v156, %v157
    %v159 = vsel %vm44, %v119, 0.0
    %v160 = vadd.f32 %v158, %v159
    %v161 = vsel %vm44, %v120, 0.0
    %v162 = vadd.f32 %v160, %v161
    %v163 = vsel %vm44, %v121, 0.0
    %v164 = vadd.f32 %v162, %v163
    %v165 = vsel %vm44, %v122, 0.0
    %v166 = vadd.f32 %v164, %v165
    %v167 = vsel %vm44, %v123, 0.0
    %v168 = vadd.f32 %v166, %v167
    %v169 = vsel %vm44, %v124, 0.0
    %v170 = vadd.f32 %v168, %v169
    %v171 = vsel %vm44, %v125, 0.0
    %v172 = vadd.f32 %v170, %v171
    %v173 = vrot.slane %v172, 4
    %v174 = vadd.f32 %v172, %v173
    %v175 = vrot.slane %v174, 2
    %v176 = vadd.f32 %v174, %v175
    %v177 = vrot.slane %v176, 1
    %v178 = vadd.f32 %v176, %v177
    %v179 = vadd.f32 %v101, %v178
    %180 = vst.msk [vmem:[#allocation4] sm:$0x1] %vm99, %v179
    // Predicated region
    $region10: #{tpu_custom_call.1} parent=1 // pred_check
      %p181 = pneg %p12
    $region11: #{tpu_custom_call.1} parent=1 // pred_check_branch
      %183 = sbr.rel (%p181) target = $region13
    $region12: #{tpu_custom_call.1} parent=1 // pred_region
      %v184 = vld [vmem:[#allocation2] sm:$0x1]
      %v185 = vmul.f32 %v184, 0.0125
      %186 = vst.msk [vmem:[#allocation2] sm:$0x1] %vm99, %v185
      %v187 = vld [vmem:[#allocation4] sm:$0x1]
      %v188 = vmul.f32 %v187, 0.0125
      %v189 = vmul.f32 %v185, %v185
      %v190 = vsub.f32 %v188, %v189
      %191 = vst.msk [vmem:[#allocation4] sm:$0x1] %vm99, %v190
    $region13: #{tpu_custom_call.1} parent=1 // pred_fallthru
      _
    // Predicated region
    $region14: #{tpu_custom_call.1} parent=1 // pred_check
      _
    $region15: #{tpu_custom_call.1} parent=1 // pred_check_branch
      %193 = sbr.rel (0) target = $region17
    $region16: #{tpu_custom_call.1} parent=1 // pred_region
      %195 = vsyncadd [#allocation3], 0
      %s197 = sshll.u32 [#allocation2], 4
      %s198 = int_to_ptr.vmem [resolvable:$true] %s197
      %s199 = sshll.u32 %s1, 4
      %s200 = int_to_ptr.hbm [resolvable:$true] %s199
      %202 = dma.vmem_to_hbm [thread:$0]  %s198, 16, %s200, [#allocation3]
    $region17: #{tpu_custom_call.1} parent=1 // pred_fallthru
      _
    // Predicated region
    $region18: #{tpu_custom_call.1} parent=1 // pred_check
      _
    $region19: #{tpu_custom_call.1} parent=1 // pred_check_branch
      %204 = sbr.rel (0) target = $region21
    $region20: #{tpu_custom_call.1} parent=1 // pred_region
      %206 = vsyncadd [#allocation5], 0
      %s208 = sshll.u32 [#allocation4], 4
      %s209 = int_to_ptr.vmem [resolvable:$true] %s208
      %s210 = sshll.u32 %s2, 4
      %s211 = int_to_ptr.hbm [resolvable:$true] %s210
      %213 = dma.vmem_to_hbm [thread:$0]  %s209, 16, %s211, [#allocation5]
    $region21: #{tpu_custom_call.1} parent=1 // pred_fallthru
      _
    // Predicated region
    $region22: #{tpu_custom_call.1} parent=1 // pred_check
      _
    $region23: #{tpu_custom_call.1} parent=1 // pred_check_branch
      %215 = sbr.rel (0) target = $region25
    $region24: #{tpu_custom_call.1} parent=1 // pred_region
      %217 = dma.done [#allocation3], 16
    $region25: #{tpu_custom_call.1} parent=1 // pred_fallthru
      _
    // Predicated region
    $region26: #{tpu_custom_call.1} parent=1 // pred_check
      _
    $region27: #{tpu_custom_call.1} parent=1 // pred_check_branch
      %219 = sbr.rel (0) target = $region29
    $region28: #{tpu_custom_call.1} parent=1 // pred_region
      %221 = dma.done [#allocation5], 16
    $region29: #{tpu_custom_call.1} parent=1 // pred_fallthru
      _
    %222 = vsyncpa [#allocation3], 1
    %223 = vsyncpa [#allocation5], 1

</llo_original>
